<compile_context>
chip_gen: v5e
topology: v5e:2x2
jax: 0.10.0
libtpu: 0.0.40
codegen_flags: <defaults>
</compile_context>

<pallas_src>
import functools

import jax
import jax.numpy as jnp
from jax.experimental import pallas as pl
from jax.experimental.pallas import tpu as pltpu


# ---------------------------------------------------------------------------
# Fused kernel: (concat) -> conv1 -> BN1 -> ReLU -> conv2 -> BN2 -> ReLU
# ---------------------------------------------------------------------------
def _nested_block_kernel(*refs, has_skip, nb, height, x_lanes):
    if has_skip:
        (x_ref, s_ref, w1_ref, s1_ref, b1_ref,
         w2_ref, s2_ref, b2_ref, o_ref, in_pad, mid_pad) = refs
    else:
        (x_ref, w1_ref, s1_ref, b1_ref,
         w2_ref, s2_ref, b2_ref, o_ref, in_pad, mid_pad) = refs
        s_ref = None

    hp = height + 2                      # padded rows per image
    m_rows = nb * hp - 2                 # matmul M (covers all nb images)

    zin = jnp.zeros((1, in_pad.shape[1]), in_pad.dtype)
    zmid = jnp.zeros((1, mid_pad.shape[1]), mid_pad.dtype)

    # ---- stage inputs (channel concat fused in the lane dimension) --------
    # Halo rows are re-zeroed every step: with dimension_semantics=
    # ("parallel",) grid steps may be split across TensorCores (v7x), each
    # with a private scratch, so an init-only-at-step-0 pattern is unsafe.
    for i in range(nb):
        r0 = i * hp
        in_pad[r0:r0 + 1, :] = zin
        in_pad[r0 + height + 1:r0 + height + 2, :] = zin
        in_pad[r0 + 1:r0 + 1 + height, 0:x_lanes] = x_ref[i]
        if has_skip:
            in_pad[r0 + 1:r0 + 1 + height, x_lanes:] = s_ref[i]
        mid_pad[r0:r0 + 1, :] = zmid
        mid_pad[r0 + height + 1:r0 + height + 2, :] = zmid

    # ---- conv1: 3 row-shifted matmuls over all nb images at once ----------
    acc = jnp.dot(in_pad[0:m_rows, :], w1_ref[0],
                  preferred_element_type=jnp.float32)
    acc += jnp.dot(in_pad[1:m_rows + 1, :], w1_ref[1],
                   preferred_element_type=jnp.float32)
    acc += jnp.dot(in_pad[2:m_rows + 2, :], w1_ref[2],
                   preferred_element_type=jnp.float32)
    mid = jnp.maximum(acc * s1_ref[...] + b1_ref[...], 0.0)   # BN1 + ReLU (f32)

    # ---- stage the intermediate into its padded scratch (stays in VMEM) ---
    # Rows of `mid` that straddle two images are garbage and are skipped.
    for i in range(nb):
        r0 = i * hp
        mid_pad[r0 + 1:r0 + 1 + height, :] = (
            mid[r0:r0 + height].astype(mid_pad.dtype))

    # ---- conv2 -------------------------------------------------------------
    acc2 = jnp.dot(mid_pad[0:m_rows, :], w2_ref[0],
                   preferred_element_type=jnp.float32)
    acc2 += jnp.dot(mid_pad[1:m_rows + 1, :], w2_ref[1],
                    preferred_element_type=jnp.float32)
    acc2 += jnp.dot(mid_pad[2:m_rows + 2, :], w2_ref[2],
                    preferred_element_type=jnp.float32)
    y = jnp.maximum(acc2 * s2_ref[...] + b2_ref[...], 0.0)    # BN2 + ReLU (f32)

    # ---- lane-dense per-image stores ---------------------------------------
    for i in range(nb):
        o_ref[i] = y[i * hp:i * hp + height].astype(o_ref.dtype)


# ---------------------------------------------------------------------------
# Weight preparation: banded matrices encoding width taps + 'same' padding
# ---------------------------------------------------------------------------
def _banded_conv_weights(w_hwio, width):
    """(3, 3, Cin, Cout) -> (3, width*Cin, width*Cout).

    band[ky, wi*Cin+ci, wo*Cout+co] = w[ky, wi-wo+1, ci, co] if 0<=wi-wo+1<3
                                      else 0
    so `rows[ky:ky+H] @ band[ky]`, summed over ky, is a 3x3 'same' conv on the
    lane-interleaved (H, W*Cin) activation layout.  (Constant-folded under
    jit; at large W tile along W instead of scaling this band.)
    """
    kh, kw, cin, cout = w_hwio.shape
    wi = jnp.arange(width)[:, None]          # input column
    wo = jnp.arange(width)[None, :]          # output column
    kx = wi - wo + (kw // 2)
    valid = (kx >= 0) & (kx < kw)
    kx_c = jnp.clip(kx, 0, kw - 1)
    g = w_hwio[:, kx_c, :, :]                # (kh, W, W, Cin, Cout)
    g = jnp.where(valid[None, :, :, None, None], g, 0.0)
    g = jnp.transpose(g, (0, 1, 3, 2, 4))    # (kh, W, Cin, W, Cout)
    return g.reshape(kh, width * cin, width * cout)


def _make_conv_bn_params(key, cin, cout, eps=1e-5):
    """Deterministic synthetic conv+BN params, BN folded into scale/bias."""
    k1, k2, k3, k4, k5, k6 = jax.random.split(key, 6)
    w = jax.random.normal(k1, (3, 3, cin, cout), jnp.float32) * 0.1   # HWIO
    b = jax.random.normal(k2, (cout,), jnp.float32) * 0.1
    gamma = 1.0 + 0.1 * jax.random.normal(k3, (cout,), jnp.float32)
    beta = 0.1 * jax.random.normal(k4, (cout,), jnp.float32)
    running_mean = 0.1 * jax.random.normal(k5, (cout,), jnp.float32)
    running_var = 0.5 + jax.random.uniform(k6, (cout,), jnp.float32)  # > 0
    inv = gamma / jnp.sqrt(running_var + eps)
    # BN(conv(x)+b) = conv(x)*inv + (b - mean)*inv + beta
    return w, inv, (b - running_mean) * inv + beta


def _choose_images_per_step(n_batch, height):
    """Pick images per grid step: push matmul M (= nb*(H+2)-2) towards ~256
    rows to amortize MXU stationary-weight pushes and per-step overhead, but
    keep >= 2 grid steps when the batch allows it so ("parallel",) semantics
    can use both v7x TensorCores."""
    rows_per_image = height + 2
    target = max(1, 256 // rows_per_image)
    nb = 1
    for cand in range(1, min(n_batch, target) + 1):
        if n_batch % cand == 0:
            nb = cand
    while nb > 1 and n_batch // nb < 2:
        nb -= 1
        while nb > 1 and n_batch % nb != 0:
            nb -= 1
    return max(nb, 1)


# ---------------------------------------------------------------------------
# NestedBlock forward (NCHW in / NCHW out, matching the PyTorch module)
# ---------------------------------------------------------------------------
def nested_block_forward(x_nchw, skip_nchw, params,
                         compute_dtype=jnp.bfloat16, images_per_step=None):
    """Matches NestedBlock.forward (eval-mode BN).

    compute_dtype: matmul/DMA dtype for activations & banded weights
    (default bfloat16: 2x MXU rate + half the DMA bytes on v6e/v7x).  BN
    affine and ReLU always run in f32 with f32 accumulation.
    """
    n_batch, c_x, height, width = x_nchw.shape
    w1, s1, b1 = params["conv1"]
    w2, s2, b2 = params["conv2"]
    c_out = w1.shape[-1]
    has_skip = skip_nchw is not None
    c_s = skip_nchw.shape[1] if has_skip else 0
    assert w1.shape[2] == c_x + c_s, (w1.shape, c_x, c_s)
    assert w2.shape[2] == c_out

    nb = (images_per_step if images_per_step is not None
          else _choose_images_per_step(n_batch, height))
    assert n_batch % nb == 0, (n_batch, nb)

    # NCHW -> lane-interleaved (N, H, W*C) rows.  This transpose is layout
    # glue at the module boundary; if the surrounding model runs NHWC
    # end-to-end, feed (N, H, W, C).reshape(N, H, W*C) directly instead.
    def to_rows(a_nchw):
        n, c, h, w = a_nchw.shape
        return jnp.transpose(a_nchw, (0, 2, 3, 1)).reshape(n, h, w * c)

    x_rows = to_rows(x_nchw).astype(compute_dtype)
    x_lanes = width * c_x
    wco = width * c_out

    # Banded weights (static prep; constant-folded under jit).  x and skip
    # weight slices are block-stacked along K -> one matmul per tap.
    w1b = _banded_conv_weights(w1[:, :, :c_x, :], width)
    if has_skip:
        w1b = jnp.concatenate(
            [w1b, _banded_conv_weights(w1[:, :, c_x:, :], width)], axis=1)
    w1b = w1b.astype(compute_dtype)
    w2b = _banded_conv_weights(w2, width).astype(compute_dtype)
    k1 = w1b.shape[1]                               # width * (c_x + c_s)

    s1t = jnp.tile(s1, width).reshape(1, wco).astype(jnp.float32)
    b1t = jnp.tile(b1, width).reshape(1, wco).astype(jnp.float32)
    s2t = jnp.tile(s2, width).reshape(1, wco).astype(jnp.float32)
    b2t = jnp.tile(b2, width).reshape(1, wco).astype(jnp.float32)

    args = [x_rows]
    in_specs = [pl.BlockSpec((nb, height, x_lanes), lambda g: (g, 0, 0))]
    if has_skip:
        s_rows = to_rows(skip_nchw).astype(compute_dtype)
        args.append(s_rows)
        in_specs.append(pl.BlockSpec((nb, height, width * c_s),
                                     lambda g: (g, 0, 0)))
    args += [w1b, s1t, b1t, w2b, s2t, b2t]
    in_specs += [
        pl.BlockSpec((3, k1, wco), lambda g: (0, 0, 0)),
        pl.BlockSpec((1, wco), lambda g: (0, 0)),
        pl.BlockSpec((1, wco), lambda g: (0, 0)),
        pl.BlockSpec((3, wco, wco), lambda g: (0, 0, 0)),
        pl.BlockSpec((1, wco), lambda g: (0, 0)),
        pl.BlockSpec((1, wco), lambda g: (0, 0)),
    ]
    scratch_shapes = [
        pltpu.VMEM((nb * (height + 2), k1), compute_dtype),   # padded x||skip
        pltpu.VMEM((nb * (height + 2), wco), compute_dtype),  # padded mid act
    ]

    out_rows = pl.pallas_call(
        functools.partial(_nested_block_kernel, has_skip=has_skip,
                          nb=nb, height=height, x_lanes=x_lanes),
        out_shape=jax.ShapeDtypeStruct((n_batch, height, wco), x_nchw.dtype),
        grid_spec=pltpu.PrefetchScalarGridSpec(
            num_scalar_prefetch=0,
            grid=(n_batch // nb,),
            in_specs=in_specs,
            out_specs=pl.BlockSpec((nb, height, wco), lambda g: (g, 0, 0)),
            scratch_shapes=scratch_shapes,
        ),
        compiler_params=pltpu.CompilerParams(
            dimension_semantics=("parallel",),   # v7x: split steps across TCs
        ),
    )(*args)

    # (N, H, W*Cout) -> NCHW  (boundary layout glue)
    return jnp.transpose(out_rows.reshape(n_batch, height, width, c_out),
                         (0, 3, 1, 2))


# ---------------------------------------------------------------------------
# Pure-JAX reference (correctness check)
# ---------------------------------------------------------------------------
def _ref_conv_bn_relu(x_nhwc, w_hwio, scale, bias):
    y = jax.lax.conv_general_dilated(
        x_nhwc, w_hwio, window_strides=(1, 1), padding="SAME",
        dimension_numbers=("NHWC", "HWIO", "NHWC"))
    y = y * scale[None, None, None, :] + bias[None, None, None, :]
    return jnp.maximum(y, 0.0)


def _ref_nested_block(x_nchw, skip_nchw, params):
    if skip_nchw is not None:
        x_nchw = jnp.concatenate([x_nchw, skip_nchw], axis=1)
    x = jnp.transpose(x_nchw, (0, 2, 3, 1))
    w1, s1, b1 = params["conv1"]
    w2, s2, b2 = params["conv2"]
    x = _ref_conv_bn_relu(x, w1, s1, b1)
    x = _ref_conv_bn_relu(x, w2, s2, b2)
    return jnp.transpose(x, (0, 3, 1, 2))


if __name__ == "__main__":
    # Small shapes consistent with the module.  W * Cout = 128 -> lane dense.
    N, Cin, Cskip, Cout, H, W = 2, 4, 4, 8, 16, 16

    root = jax.random.PRNGKey(0)
    kx_, ks_, kp1, kp2 = jax.random.split(root, 4)

    x = jax.random.normal(kx_, (N, Cin, H, W), jnp.float32)          # NCHW
    skip = jax.random.normal(ks_, (N, Cskip, H, W), jnp.float32)     # NCHW

    params = {
        "conv1": _make_conv_bn_params(kp1, Cin + Cskip, Cout),
        "conv2": _make_conv_bn_params(kp2, Cin, Cout) if False else
                 _make_conv_bn_params(kp2, Cout, Cout),
    }
    ref = _ref_nested_block(x, skip, params)

    # 1) f32 compute path (tight-ish check of the fused-kernel math).
    fwd_f32 = jax.jit(functools.partial(
        nested_block_forward, params=params, compute_dtype=jnp.float32))
    out_f32 = fwd_f32(x, skip)
    jax.block_until_ready(out_f32)
    assert out_f32.shape == (N, Cout, H, W), out_f32.shape
    err = float(jnp.max(jnp.abs(out_f32 - ref)))
    assert err < 3e-2, err

    # 2) multi-image-per-step path (nb=2, single grid step, M = 2*(H+2)-2).
    fwd_nb2 = jax.jit(functools.partial(
        nested_block_forward, params=params, compute_dtype=jnp.float32,
        images_per_step=2))
    out_nb2 = fwd_nb2(x, skip)
    jax.block_until_ready(out_nb2)
    err_nb2 = float(jnp.max(jnp.abs(out_nb2 - ref)))
    assert err_nb2 < 3e-2, err_nb2

    # 3) default bf16 compute path (looser tolerance vs the f32 reference).
    fwd_bf16 = jax.jit(functools.partial(nested_block_forward, params=params))
    out_bf16 = fwd_bf16(x, skip)
    jax.block_until_ready(out_bf16)
    err_bf = float(jnp.max(jnp.abs(out_bf16 - ref)))
    assert err_bf < 2e-1, err_bf

    # 4) skip_connection=None path (i.e. skip_channels == 0 in the module).
    params_ns = {
        "conv1": _make_conv_bn_params(kp1, Cin, Cout),
        "conv2": _make_conv_bn_params(kp2, Cout, Cout),
    }
    fwd_ns = jax.jit(functools.partial(
        nested_block_forward, skip_nchw=None, params=params_ns,
        compute_dtype=jnp.float32))
    out_ns = fwd_ns(x)
    jax.block_until_ready(out_ns)
    ref_ns = _ref_nested_block(x, None, params_ns)
    assert out_ns.shape == (N, Cout, H, W), out_ns.shape
    err_ns = float(jnp.max(jnp.abs(out_ns - ref_ns)))
    assert err_ns < 3e-2, err_ns

    print("KERNEL_OK")
</pallas_src>

<mosaic_0001>
module attributes {stable_mosaic.version = 11 : i64} {
  func.func @_nested_block_kernel(%arg0: i32, %arg1: memref<1x16x64xf32, #tpu.memory_space<vmem>>, %arg2: memref<1x16x64xf32, #tpu.memory_space<vmem>>, %arg3: memref<3x128x128xf32, #tpu.memory_space<vmem>>, %arg4: memref<1x128xf32, #tpu.memory_space<vmem>>, %arg5: memref<1x128xf32, #tpu.memory_space<vmem>>, %arg6: memref<3x128x128xf32, #tpu.memory_space<vmem>>, %arg7: memref<1x128xf32, #tpu.memory_space<vmem>>, %arg8: memref<1x128xf32, #tpu.memory_space<vmem>>, %arg9: memref<1x16x128xf32, #tpu.memory_space<vmem>>, %arg10: memref<18x128xf32, #tpu.memory_space<vmem>>, %arg11: memref<18x128xf32, #tpu.memory_space<vmem>>) attributes {dimension_semantics = [#tpu.dimension_semantics<parallel>], iteration_bounds = array<i64: 2>, scalar_prefetch = 0 : i64, scratch_operands = 2 : i64, tpu.core_type = #tpu.core_type<tc>, window_params = [{transform_indices = @transform_0, window_bounds = array<i64: 1, 16, 64>}, {transform_indices = @transform_1, window_bounds = array<i64: 1, 16, 64>}, {pipeline_mode = #tpu.pipeline_mode<synchronous>, transform_indices = @transform_2, window_bounds = array<i64: 3, 128, 128>}, {pipeline_mode = #tpu.pipeline_mode<synchronous>, transform_indices = @transform_3, window_bounds = array<i64: 1, 128>}, {pipeline_mode = #tpu.pipeline_mode<synchronous>, transform_indices = @transform_4, window_bounds = array<i64: 1, 128>}, {pipeline_mode = #tpu.pipeline_mode<synchronous>, transform_indices = @transform_5, window_bounds = array<i64: 3, 128, 128>}, {pipeline_mode = #tpu.pipeline_mode<synchronous>, transform_indices = @transform_6, window_bounds = array<i64: 1, 128>}, {pipeline_mode = #tpu.pipeline_mode<synchronous>, transform_indices = @transform_7, window_bounds = array<i64: 1, 128>}, {transform_indices = @transform_8, window_bounds = array<i64: 1, 16, 128>}]} {
    %cst = arith.constant 0.000000e+00 : f32
    %0 = vector.broadcast %cst : f32 to vector<1x128xf32>
    %cst_0 = arith.constant 0.000000e+00 : f32
    %1 = vector.broadcast %cst_0 : f32 to vector<1x128xf32>
    %c0 = arith.constant 0 : index
    %c0_1 = arith.constant 0 : index
    %2 = vector.load %arg10[%c0, %c0_1] : memref<18x128xf32, #tpu.memory_space<vmem>>, vector<1x128xf32>
    tpu.vector_store %arg10[%c0, %c0_1], %0 {strides = array<i32>} : memref<18x128xf32, #tpu.memory_space<vmem>>, vector<1x128xf32>,
    %c17 = arith.constant 17 : index
    %c0_2 = arith.constant 0 : index
    %3 = vector.load %arg10[%c17, %c0_2] : memref<18x128xf32, #tpu.memory_space<vmem>>, vector<1x128xf32>
    tpu.vector_store %arg10[%c17, %c0_2], %0 {strides = array<i32>} : memref<18x128xf32, #tpu.memory_space<vmem>>, vector<1x128xf32>,
    %c0_3 = arith.constant 0 : index
    %c0_4 = arith.constant 0 : index
    %c0_5 = arith.constant 0 : index
    %4 = vector.load %arg1[%c0_3, %c0_4, %c0_5] : memref<1x16x64xf32, #tpu.memory_space<vmem>>, vector<1x16x64xf32>
    %5 = vector.shape_cast %4 : vector<1x16x64xf32> to vector<16x64xf32>
    %c1 = arith.constant 1 : index
    %c0_6 = arith.constant 0 : index
    %6 = vector.load %arg10[%c1, %c0_6] : memref<18x128xf32, #tpu.memory_space<vmem>>, vector<16x64xf32>
    tpu.vector_store %arg10[%c1, %c0_6], %5 {strides = array<i32>} : memref<18x128xf32, #tpu.memory_space<vmem>>, vector<16x64xf32>,
    %c0_7 = arith.constant 0 : index
    %c0_8 = arith.constant 0 : index
    %c0_9 = arith.constant 0 : index
    %7 = vector.load %arg2[%c0_7, %c0_8, %c0_9] : memref<1x16x64xf32, #tpu.memory_space<vmem>>, vector<1x16x64xf32>
    %8 = vector.shape_cast %7 : vector<1x16x64xf32> to vector<16x64xf32>
    %c1_10 = arith.constant 1 : index
    %c64 = arith.constant 64 : index
    %9 = vector.load %arg10[%c1_10, %c64] : memref<18x128xf32, #tpu.memory_space<vmem>>, vector<16x64xf32>
    tpu.vector_store %arg10[%c1_10, %c64], %8 {strides = array<i32>} : memref<18x128xf32, #tpu.memory_space<vmem>>, vector<16x64xf32>,
    %c0_11 = arith.constant 0 : index
    %c0_12 = arith.constant 0 : index
    %10 = vector.load %arg11[%c0_11, %c0_12] : memref<18x128xf32, #tpu.memory_space<vmem>>, vector<1x128xf32>
    tpu.vector_store %arg11[%c0_11, %c0_12], %1 {strides = array<i32>} : memref<18x128xf32, #tpu.memory_space<vmem>>, vector<1x128xf32>,
    %c17_13 = arith.constant 17 : index
    %c0_14 = arith.constant 0 : index
    %11 = vector.load %arg11[%c17_13, %c0_14] : memref<18x128xf32, #tpu.memory_space<vmem>>, vector<1x128xf32>
    tpu.vector_store %arg11[%c17_13, %c0_14], %1 {strides = array<i32>} : memref<18x128xf32, #tpu.memory_space<vmem>>, vector<1x128xf32>,
    %c0_15 = arith.constant 0 : index
    %c0_16 = arith.constant 0 : index
    %12 = vector.load %arg10[%c0_15, %c0_16] : memref<18x128xf32, #tpu.memory_space<vmem>>, vector<16x128xf32>
    %c0_17 = arith.constant 0 : index
    %c0_18 = arith.constant 0 : index
    %c0_19 = arith.constant 0 : index
    %13 = vector.load %arg3[%c0_17, %c0_18, %c0_19] : memref<3x128x128xf32, #tpu.memory_space<vmem>>, vector<1x128x128xf32>
    %14 = vector.shape_cast %13 : vector<1x128x128xf32> to vector<128x128xf32>
    %cst_20 = arith.constant dense<0.000000e+00> : vector<16x128xf32>
    %15 = tpu.matmul %12, %14, %cst_20 {dimension_numbers = #tpu.dot_dimension_numbers<[1], [0], [0], [1], [0, 0, 1, 1], [], []>} : vector<16x128xf32>, vector<128x128xf32>, vector<16x128xf32> -> vector<16x128xf32>
    %c1_21 = arith.constant 1 : index
    %c0_22 = arith.constant 0 : index
    %16 = vector.load %arg10[%c1_21, %c0_22] : memref<18x128xf32, #tpu.memory_space<vmem>>, vector<16x128xf32>
    %c1_23 = arith.constant 1 : index
    %c0_24 = arith.constant 0 : index
    %c0_25 = arith.constant 0 : index
    %17 = vector.load %arg3[%c1_23, %c0_24, %c0_25] : memref<3x128x128xf32, #tpu.memory_space<vmem>>, vector<1x128x128xf32>
    %18 = vector.shape_cast %17 : vector<1x128x128xf32> to vector<128x128xf32>
    %cst_26 = arith.constant dense<0.000000e+00> : vector<16x128xf32>
    %19 = tpu.matmul %16, %18, %cst_26 {dimension_numbers = #tpu.dot_dimension_numbers<[1], [0], [0], [1], [0, 0, 1, 1], [], []>} : vector<16x128xf32>, vector<128x128xf32>, vector<16x128xf32> -> vector<16x128xf32>
    %20 = arith.addf %15, %19 : vector<16x128xf32>
    %c2 = arith.constant 2 : index
    %c0_27 = arith.constant 0 : index
    %21 = vector.load %arg10[%c2, %c0_27] : memref<18x128xf32, #tpu.memory_space<vmem>>, vector<16x128xf32>
    %c2_28 = arith.constant 2 : index
    %c0_29 = arith.constant 0 : index
    %c0_30 = arith.constant 0 : index
    %22 = vector.load %arg3[%c2_28, %c0_29, %c0_30] : memref<3x128x128xf32, #tpu.memory_space<vmem>>, vector<1x128x128xf32>
    %23 = vector.shape_cast %22 : vector<1x128x128xf32> to vector<128x128xf32>
    %cst_31 = arith.constant dense<0.000000e+00> : vector<16x128xf32>
    %24 = tpu.matmul %21, %23, %cst_31 {dimension_numbers = #tpu.dot_dimension_numbers<[1], [0], [0], [1], [0, 0, 1, 1], [], []>} : vector<16x128xf32>, vector<128x128xf32>, vector<16x128xf32> -> vector<16x128xf32>
    %25 = arith.addf %20, %24 : vector<16x128xf32>
    %c0_32 = arith.constant 0 : index
    %c0_33 = arith.constant 0 : index
    %26 = vector.load %arg4[%c0_32, %c0_33] : memref<1x128xf32, #tpu.memory_space<vmem>>, vector<1x128xf32>
    %27 = vector.broadcast %26 : vector<1x128xf32> to vector<16x128xf32>
    %28 = arith.mulf %25, %27 : vector<16x128xf32>
    %c0_34 = arith.constant 0 : index
    %c0_35 = arith.constant 0 : index
    %29 = vector.load %arg5[%c0_34, %c0_35] : memref<1x128xf32, #tpu.memory_space<vmem>>, vector<1x128xf32>
    %30 = vector.broadcast %29 : vector<1x128xf32> to vector<16x128xf32>
    %31 = arith.addf %28, %30 : vector<16x128xf32>
    %cst_36 = arith.constant 0.000000e+00 : f32
    %32 = vector.broadcast %cst_36 : f32 to vector<16x128xf32>
    %33 = arith.maximumf %31, %32 : vector<16x128xf32>
    %c1_37 = arith.constant 1 : index
    %c0_38 = arith.constant 0 : index
    %34 = vector.load %arg11[%c1_37, %c0_38] : memref<18x128xf32, #tpu.memory_space<vmem>>, vector<16x128xf32>
    tpu.vector_store %arg11[%c1_37, %c0_38], %33 {strides = array<i32>} : memref<18x128xf32, #tpu.memory_space<vmem>>, vector<16x128xf32>,
    %c0_39 = arith.constant 0 : index
    %c0_40 = arith.constant 0 : index
    %35 = vector.load %arg11[%c0_39, %c0_40] : memref<18x128xf32, #tpu.memory_space<vmem>>, vector<16x128xf32>
    %c0_41 = arith.constant 0 : index
    %c0_42 = arith.constant 0 : index
    %c0_43 = arith.constant 0 : index
    %36 = vector.load %arg6[%c0_41, %c0_42, %c0_43] : memref<3x128x128xf32, #tpu.memory_space<vmem>>, vector<1x128x128xf32>
    %37 = vector.shape_cast %36 : vector<1x128x128xf32> to vector<128x128xf32>
    %cst_44 = arith.constant dense<0.000000e+00> : vector<16x128xf32>
    %38 = tpu.matmul %35, %37, %cst_44 {dimension_numbers = #tpu.dot_dimension_numbers<[1], [0], [0], [1], [0, 0, 1, 1], [], []>} : vector<16x128xf32>, vector<128x128xf32>, vector<16x128xf32> -> vector<16x128xf32>
    %c1_45 = arith.constant 1 : index
    %c0_46 = arith.constant 0 : index
    %39 = vector.load %arg11[%c1_45, %c0_46] : memref<18x128xf32, #tpu.memory_space<vmem>>, vector<16x128xf32>
    %c1_47 = arith.constant 1 : index
    %c0_48 = arith.constant 0 : index
    %c0_49 = arith.constant 0 : index
    %40 = vector.load %arg6[%c1_47, %c0_48, %c0_49] : memref<3x128x128xf32, #tpu.memory_space<vmem>>, vector<1x128x128xf32>
    %41 = vector.shape_cast %40 : vector<1x128x128xf32> to vector<128x128xf32>
    %cst_50 = arith.constant dense<0.000000e+00> : vector<16x128xf32>
    %42 = tpu.matmul %39, %41, %cst_50 {dimension_numbers = #tpu.dot_dimension_numbers<[1], [0], [0], [1], [0, 0, 1, 1], [], []>} : vector<16x128xf32>, vector<128x128xf32>, vector<16x128xf32> -> vector<16x128xf32>
    %43 = arith.addf %38, %42 : vector<16x128xf32>
    %c2_51 = arith.constant 2 : index
    %c0_52 = arith.constant 0 : index
    %44 = vector.load %arg11[%c2_51, %c0_52] : memref<18x128xf32, #tpu.memory_space<vmem>>, vector<16x128xf32>
    %c2_53 = arith.constant 2 : index
    %c0_54 = arith.constant 0 : index
    %c0_55 = arith.constant 0 : index
    %45 = vector.load %arg6[%c2_53, %c0_54, %c0_55] : memref<3x128x128xf32, #tpu.memory_space<vmem>>, vector<1x128x128xf32>
    %46 = vector.shape_cast %45 : vector<1x128x128xf32> to vector<128x128xf32>
    %cst_56 = arith.constant dense<0.000000e+00> : vector<16x128xf32>
    %47 = tpu.matmul %44, %46, %cst_56 {dimension_numbers = #tpu.dot_dimension_numbers<[1], [0], [0], [1], [0, 0, 1, 1], [], []>} : vector<16x128xf32>, vector<128x128xf32>, vector<16x128xf32> -> vector<16x128xf32>
    %48 = arith.addf %43, %47 : vector<16x128xf32>
    %c0_57 = arith.constant 0 : index
    %c0_58 = arith.constant 0 : index
    %49 = vector.load %arg7[%c0_57, %c0_58] : memref<1x128xf32, #tpu.memory_space<vmem>>, vector<1x128xf32>
    %50 = vector.broadcast %49 : vector<1x128xf32> to vector<16x128xf32>
    %51 = arith.mulf %48, %50 : vector<16x128xf32>
    %c0_59 = arith.constant 0 : index
    %c0_60 = arith.constant 0 : index
    %52 = vector.load %arg8[%c0_59, %c0_60] : memref<1x128xf32, #tpu.memory_space<vmem>>, vector<1x128xf32>
    %53 = vector.broadcast %52 : vector<1x128xf32> to vector<16x128xf32>
    %54 = arith.addf %51, %53 : vector<16x128xf32>
    %cst_61 = arith.constant 0.000000e+00 : f32
    %55 = vector.broadcast %cst_61 : f32 to vector<16x128xf32>
    %56 = arith.maximumf %54, %55 : vector<16x128xf32>
    %c0_62 = arith.constant 0 : index
    %c0_63 = arith.constant 0 : index
    %c0_64 = arith.constant 0 : index
    %57 = vector.load %arg9[%c0_62, %c0_63, %c0_64] : memref<1x16x128xf32, #tpu.memory_space<vmem>>, vector<1x16x128xf32>
    %58 = vector.shape_cast %57 : vector<1x16x128xf32> to vector<16x128xf32>
    %59 = vector.shape_cast %56 : vector<16x128xf32> to vector<1x16x128xf32>
    tpu.vector_store %arg9[%c0_62, %c0_63, %c0_64], %59 {strides = array<i32>} : memref<1x16x128xf32, #tpu.memory_space<vmem>>, vector<1x16x128xf32>,
    return
  }
  func.func @transform_0(%arg0: i32) -> (i32, i32, i32) {
    %c0_i32 = arith.constant 0 : i32
    %c0_i32_0 = arith.constant 0 : i32
    %c0_i32_1 = arith.constant 0 : i32
    return %arg0, %c0_i32, %c0_i32_0 : i32, i32, i32
  }
  func.func @transform_1(%arg0: i32) -> (i32, i32, i32) {
    %c0_i32 = arith.constant 0 : i32
    %c0_i32_0 = arith.constant 0 : i32
    %c0_i32_1 = arith.constant 0 : i32
    return %arg0, %c0_i32, %c0_i32_0 : i32, i32, i32
  }
  func.func @transform_2(%arg0: i32) -> (i32, i32, i32) {
    %c0_i32 = arith.constant 0 : i32
    %c0_i32_0 = arith.constant 0 : i32
    %c0_i32_1 = arith.constant 0 : i32
    %c0_i32_2 = arith.constant 0 : i32
    return %c0_i32, %c0_i32_0, %c0_i32_1 : i32, i32, i32
  }
  func.func @transform_3(%arg0: i32) -> (i32, i32) {
    %c0_i32 = arith.constant 0 : i32
    %c0_i32_0 = arith.constant 0 : i32
    %c0_i32_1 = arith.constant 0 : i32
    return %c0_i32, %c0_i32_0 : i32, i32
  }
  func.func @transform_4(%arg0: i32) -> (i32, i32) {
    %c0_i32 = arith.constant 0 : i32
    %c0_i32_0 = arith.constant 0 : i32
    %c0_i32_1 = arith.constant 0 : i32
    return %c0_i32, %c0_i32_0 : i32, i32
  }
  func.func @transform_5(%arg0: i32) -> (i32, i32, i32) {
    %c0_i32 = arith.constant 0 : i32
    %c0_i32_0 = arith.constant 0 : i32
    %c0_i32_1 = arith.constant 0 : i32
    %c0_i32_2 = arith.constant 0 : i32
    return %c0_i32, %c0_i32_0, %c0_i32_1 : i32, i32, i32
  }
  func.func @transform_6(%arg0: i32) -> (i32, i32) {
    %c0_i32 = arith.constant 0 : i32
    %c0_i32_0 = arith.constant 0 : i32
    %c0_i32_1 = arith.constant 0 : i32
    return %c0_i32, %c0_i32_0 : i32, i32
  }
  func.func @transform_7(%arg0: i32) -> (i32, i32) {
    %c0_i32 = arith.constant 0 : i32
    %c0_i32_0 = arith.constant 0 : i32
    %c0_i32_1 = arith.constant 0 : i32
    return %c0_i32, %c0_i32_0 : i32, i32
  }
  func.func @transform_8(%arg0: i32) -> (i32, i32, i32) {
    %c0_i32 = arith.constant 0 : i32
    %c0_i32_0 = arith.constant 0 : i32
    %c0_i32_1 = arith.constant 0 : i32
    return %arg0, %c0_i32, %c0_i32_0 : i32, i32, i32
  }
}

</mosaic_0001>

<llo_original>
// kernel: tile.18
$region0: #{tile.18}
  #allocation0 [shape = 's32[1]{0}', space=sflag, size = 0x4, scoped, tag = 'scoped memory for tile.18']
  %s0 = inlined_call_operand.vmem [shape: f32[8], index: 0, kind: input, shape index: {}]
  %s1 = inlined_call_operand.vmem [shape: f32[16,8], index: 1, kind: output, shape index: {}]
  // Predicated region
  $region2: #{tile.18} parent=0 // pred_check
    _
  $region3: #{tile.18} parent=0 // pred_check_branch
    %3 = sbr.rel (0) target = $region5
  $region4: #{tile.18} parent=0 // pred_region
    _
  $region5: #{tile.18} parent=0 // pred_fallthru
    _
  %v4 = vld [vmem:[%s0] ss:$0 sm:$0xff]
  %5 = vst [vmem:[%s1] sm:$0xff] %v4
  %s6 = scalar_lea.vmem %s1, 8
  %7 = vst [vmem:[%s6] sm:$0xff] %v4

// kernel: tile.19
$region0: #{tile.19}
  %s0 = inlined_call_operand.vmem [shape: f32[16,8], index: 0, kind: input, shape index: {}]
  %s1 = inlined_call_operand.vmem [shape: f32[1,128], index: 1, kind: output, shape index: {}]
  $region1: #{tile.19} parent=0
    #allocation0 [shape = 'u8[4096]{0}', space=vmem, size = 0x1000, scoped, tag = 'scoped mem for output reshape']
    %v2 = vld [vmem:[%s0] sm:$0x1]
    %vm3 = vcmask 64512
    %4 = vst.msk [vmem:[#allocation0] sm:$0x1] %vm3, %v2
    %s5 = scalar_lea.vmem %s0, 15
    %v6 = vld [vmem:[%s5] sm:$0x1]
    %7 = vrot.lane.b32.xlu0 %v6, 120
    %v8 = vpop.permute.xlu0 %7
    %vm9 = vcmask 1048512
    %10 = vst.msk [vmem:[#allocation0] sm:$0x1] %vm9, %v8
    %s11 = scalar_lea.vmem %s0, 14
    %v12 = vld [vmem:[%s11] sm:$0x1]
    %13 = vrot.lane.b32.xlu0 %v12, 112
    %v14 = vpop.permute.xlu0 %13
    %vm15 = vcmask 982912
    %16 = vst.msk [vmem:[#allocation0] sm:$0x1] %vm15, %v14
    %s17 = scalar_lea.vmem %s0, 13
    %v18 = vld [vmem:[%s17] sm:$0x1]
    %19 = vrot.lane.b32.xlu0 %v18, 104
    %v20 = vpop.permute.xlu0 %19
    %vm21 = vcmask 917312
    %22 = vst.msk [vmem:[#allocation0] sm:$0x1] %vm21, %v20
    %s23 = scalar_lea.vmem %s0, 12
    %v24 = vld [vmem:[%s23] sm:$0x1]
    %25 = vrot.lane.b32.xlu0 %v24, 96
    %v26 = vpop.permute.xlu0 %25
    %vm27 = vcmask 851712
    %28 = vst.msk [vmem:[#allocation0] sm:$0x1] %vm27, %v26
    %s29 = scalar_lea.vmem %s0, 11
    %v30 = vld [vmem:[%s29] sm:$0x1]
    %31 = vrot.lane.b32.xlu0 %v30, 88
    %v32 = vpop.permute.xlu0 %31
    %vm33 = vcmask 786112
    %34 = vst.msk [vmem:[#allocation0] sm:$0x1] %vm33, %v32
    %s35 = scalar_lea.vmem %s0, 10
    %v36 = vld [vmem:[%s35] sm:$0x1]
    %37 = vrot.lane.b32.xlu0 %v36, 80
    %v38 = vpop.permute.xlu0 %37
    %vm39 = vcmask 720512
    %40 = vst.msk [vmem:[#allocation0] sm:$0x1] %vm39, %v38
    %s41 = scalar_lea.vmem %s0, 9
    %v42 = vld [vmem:[%s41] sm:$0x1]
    %43 = vrot.lane.b32.xlu0 %v42, 72
    %v44 = vpop.permute.xlu0 %43
    %vm45 = vcmask 654912
    %46 = vst.msk [vmem:[#allocation0] sm:$0x1] %vm45, %v44
    %s47 = scalar_lea.vmem %s0, 8
    %v48 = vld [vmem:[%s47] sm:$0x1]
    %49 = vrot.lane.b32.xlu0 %v48, 64
    %v50 = vpop.permute.xlu0 %49
    %vm51 = vcmask 589312
    %52 = vst.msk [vmem:[#allocation0] sm:$0x1] %vm51, %v50
    %s53 = scalar_lea.vmem %s0, 7
    %v54 = vld [vmem:[%s53] sm:$0x1]
    %55 = vrot.lane.b32.xlu0 %v54, 56
    %v56 = vpop.permute.xlu0 %55
    %vm57 = vcmask 523712
    %58 = vst.msk [vmem:[#allocation0] sm:$0x1] %vm57, %v56
    %s59 = scalar_lea.vmem %s0, 6
    %v60 = vld [vmem:[%s59] sm:$0x1]
    %61 = vrot.lane.b32.xlu0 %v60, 48
    %v62 = vpop.permute.xlu0 %61
    %vm63 = vcmask 458112
    %64 = vst.msk [vmem:[#allocation0] sm:$0x1] %vm63, %v62
    %s65 = scalar_lea.vmem %s0, 5
    %v66 = vld [vmem:[%s65] sm:$0x1]
    %67 = vrot.lane.b32.xlu0 %v66, 40
    %v68 = vpop.permute.xlu0 %67
    %vm69 = vcmask 392512
    %70 = vst.msk [vmem:[#allocation0] sm:$0x1] %vm69, %v68
    %s71 = scalar_lea.vmem %s0, 4
    %v72 = vld [vmem:[%s71] sm:$0x1]
    %73 = vrot.lane.b32.xlu0 %v72, 32
    %v74 = vpop.permute.xlu0 %73
    %vm75 = vcmask 326912
    %76 = vst.msk [vmem:[#allocation0] sm:$0x1] %vm75, %v74
    %s77 = scalar_lea.vmem %s0, 3
    %v78 = vld [vmem:[%s77] sm:$0x1]
    %79 = vrot.lane.b32.xlu0 %v78, 24
    %v80 = vpop.permute.xlu0 %79
    %vm81 = vcmask 261312
    %82 = vst.msk [vmem:[#allocation0] sm:$0x1] %vm81, %v80
    %s83 = scalar_lea.vmem %s0, 2
    %v84 = vld [vmem:[%s83] sm:$0x1]
    %85 = vrot.lane.b32.xlu0 %v84, 16
    %v86 = vpop.permute.xlu0 %85
    %vm87 = vcmask 195712
    %88 = vst.msk [vmem:[#allocation0] sm:$0x1] %vm87, %v86
    %s89 = scalar_lea.vmem %s0, 1
    %v90 = vld [vmem:[%s89] sm:$0x1]
    %91 = vrot.lane.b32.xlu0 %v90, 8
    %v92 = vpop.permute.xlu0 %91
    %vm93 = vcmask 130112
    %94 = vst.msk [vmem:[#allocation0] sm:$0x1] %vm93, %v92
    %s96 = ssub.s32 2, 1
    %v97 = vld [vmem:[#allocation0] sm:%s96]
    %s99 = ssub.s32 2, 1
    %100 = vst [vmem:[%s1] sm:%s99] %v97

// kernel: nested_block_forward.1
$region0: #{nested_block_forward.1}
  #allocation0 [shape = 'u32[]', space=smem, size = 0x4, offset = 0x4, fixed_abs, tag = 'smem constant byte address 0x4 - core index']
  #allocation1 [shape = 'u32[72,128]{1,0:T(1,128)}', space=vmem, size = 0x9000, scoped, tag = 'internal scratch']
  #allocation2 [shape = 'f32[18,128]{1,0:T(8,128)}', space=vmem, size = 0x3000, scoped, tag = 'scratch operand']
  #allocation3 [shape = 'f32[18,128]{1,0:T(8,128)}', space=vmem, size = 0x3000, scoped, tag = 'scratch operand']
  %s0 = inlined_call_operand.vmem [shape: f32[2,16,64], index: 0, kind: input, shape index: {}]
  %s1 = inlined_call_operand.vmem [shape: f32[2,16,64], index: 1, kind: input, shape index: {}]
  %s2 = inlined_call_operand.vmem [shape: f32[3,128,128], index: 2, kind: input, shape index: {}]
  %s3 = inlined_call_operand.vmem [shape: f32[1,128], index: 3, kind: input, shape index: {}]
  %s4 = inlined_call_operand.vmem [shape: f32[1,128], index: 4, kind: input, shape index: {}]
  %s5 = inlined_call_operand.vmem [shape: f32[3,128,128], index: 5, kind: input, shape index: {}]
  %s6 = inlined_call_operand.vmem [shape: f32[1,128], index: 6, kind: input, shape index: {}]
  %s7 = inlined_call_operand.vmem [shape: f32[1,128], index: 7, kind: input, shape index: {}]
  %s8 = inlined_call_operand.vmem [shape: f32[2,16,128], index: 8, kind: output, shape index: {}]
  %s9 = sld [smem:[#allocation0]]
  $region65: #{nested_block_forward.1} parent=0
    _
  %s11 = ssub.s32 1, %s9
  %s12 = scalar_select 0, %s11, %s9
  loop: start=0, step=1, limit=4
  $region2: #{nested_block_forward.1} parent=0 // loop_pre_header
    _
  $region3: #{nested_block_forward.1} parent=0 // loop_header
    %s14 = sphi 0, %s18
    %p15 = scmp.ge.s32.totalorder %s14, 4
    %s24 = sphi 0, %s26
    %s27 = sphi 0, %s24
    %s28 = sphi 0, %s27
    %s44 = sphi 0, %s28
    %s50 = sphi 0, %s52
    %s53 = sphi 0, %s50
    %s54 = sphi 0, %s53
    %s70 = sphi 0, %s54
    %s74 = sphi 0, %s74
    %s76 = sphi 0, %s74
    %s77 = sphi 0, %s76
    %s91 = sphi 0, %s77
    %s95 = sphi 0, %s95
    %s97 = sphi 0, %s95
    %s98 = sphi 0, %s97
    %s112 = sphi 0, %s98
    %s116 = sphi 0, %s116
    %s118 = sphi 0, %s116
    %s119 = sphi 0, %s118
    %s133 = sphi 0, %s119
    %s137 = sphi 0, %s137
    %s139 = sphi 0, %s137
    %s140 = sphi 0, %s139
    %s154 = sphi 0, %s140
    %s158 = sphi 0, %s158
    %s160 = sphi 0, %s158
    %s161 = sphi 0, %s160
    %s175 = sphi 0, %s161
    %s179 = sphi 0, %s179
    %s181 = sphi 0, %s179
    %s182 = sphi 0, %s181
    %s196 = sphi 0, %s182
    %s202 = sphi 0, %s204
    %s205 = sphi 0, %s202
    %s206 = sphi 0, %s205
    %s222 = sphi 0, %s206
  $region4: #{nested_block_forward.1} parent=0 // loop_header_branch
    %17 = sbr.rel (%p15) target = $region8
  $region5: #{nested_block_forward.1} parent=0 // loop_body
    %s19 = ssub.s32 %s14, 1
    %s20 = ssub.s32 %s14, 2
    %s21 = sadd.s32 %s14, 1
    %s22 = ssub.s32 %s14, %s21
    %p23 = scmp.eq.s32.totalorder %s22, 0
    %s25 = sadd.s32 %s24, 1
    %s26 = scalar_select %p23, %s24, %s25
    %p29 = pneg %p23
    %p30 = scmp.eq.s32.totalorder %s14, 1
    %p31 = por %p29, %p30
    %p32 = scmp.ne.s32.totalorder %s24, %s27
    %p33 = scmp.eq.s32.totalorder %s14, 0
    %p34 = por %p32, %p33
    %p35 = scmp.ne.s32.totalorder %s24, %s27
    %p36 = scmp.eq.s32.totalorder %s19, 1
    %p37 = por %p35, %p36
    %p38 = scmp.ne.s32.totalorder %s27, %s28
    %p39 = scmp.eq.s32.totalorder %s19, 0
    %p40 = por %p38, %p39
    %p41 = scmp.ne.s32.totalorder %s27, %s28
    %p42 = scmp.eq.s32.totalorder %s20, 1
    %p43 = por %p41, %p42
    %p45 = scmp.ne.s32.totalorder %s28, %s44
    %p46 = scmp.eq.s32.totalorder %s20, 0
    %p47 = por %p45, %p46
    %s48 = ssub.s32 %s14, %s21
    %p49 = scmp.eq.s32.totalorder %s48, 0
    %s51 = sadd.s32 %s50, 1
    %s52 = scalar_select %p49, %s50, %s51
    %p55 = pneg %p49
    %p56 = scmp.eq.s32.totalorder %s14, 1
    %p57 = por %p55, %p56
    %p58 = scmp.ne.s32.totalorder %s50, %s53
    %p59 = scmp.eq.s32.totalorder %s14, 0
    %p60 = por %p58, %p59
    %p61 = scmp.ne.s32.totalorder %s50, %s53
    %p62 = scmp.eq.s32.totalorder %s19, 1
    %p63 = por %p61, %p62
    %p64 = scmp.ne.s32.totalorder %s53, %s54
    %p65 = scmp.eq.s32.totalorder %s19, 0
    %p66 = por %p64, %p65
    %p67 = scmp.ne.s32.totalorder %s53, %s54
    %p68 = scmp.eq.s32.totalorder %s20, 1
    %p69 = por %p67, %p68
    %p71 = scmp.ne.s32.totalorder %s54, %s70
    %p72 = scmp.eq.s32.totalorder %s20, 0
    %p73 = por %p71, %p72
    %s75 = sadd.s32 %s74, 1
    %p78 = scmp.eq.s32.totalorder %s14, 1
    %p79 = scmp.ne.s32.totalorder %s74, %s76
    %p80 = scmp.eq.s32.totalorder %s14, 0
    %p81 = por %p79, %p80
    %p82 = scmp.ne.s32.totalorder %s74, %s76
    %p83 = scmp.eq.s32.totalorder %s19, 1
    %p84 = por %p82, %p83
    %p85 = scmp.ne.s32.totalorder %s76, %s77
    %p86 = scmp.eq.s32.totalorder %s19, 0
    %p87 = por %p85, %p86
    %p88 = scmp.ne.s32.totalorder %s76, %s77
    %p89 = scmp.eq.s32.totalorder %s20, 1
    %p90 = por %p88, %p89
    %p92 = scmp.ne.s32.totalorder %s77, %s91
    %p93 = scmp.eq.s32.totalorder %s20, 0
    %p94 = por %p92, %p93
    %s96 = sadd.s32 %s95, 1
    %p99 = scmp.eq.s32.totalorder %s14, 1
    %p100 = scmp.ne.s32.totalorder %s95, %s97
    %p101 = scmp.eq.s32.totalorder %s14, 0
    %p102 = por %p100, %p101
    %p103 = scmp.ne.s32.totalorder %s95, %s97
    %p104 = scmp.eq.s32.totalorder %s19, 1
    %p105 = por %p103, %p104
    %p106 = scmp.ne.s32.totalorder %s97, %s98
    %p107 = scmp.eq.s32.totalorder %s19, 0
    %p108 = por %p106, %p107
    %p109 = scmp.ne.s32.totalorder %s97, %s98
    %p110 = scmp.eq.s32.totalorder %s20, 1
    %p111 = por %p109, %p110
    %p113 = scmp.ne.s32.totalorder %s98, %s112
    %p114 = scmp.eq.s32.totalorder %s20, 0
    %p115 = por %p113, %p114
    %s117 = sadd.s32 %s116, 1
    %p120 = scmp.eq.s32.totalorder %s14, 1
    %p121 = scmp.ne.s32.totalorder %s116, %s118
    %p122 = scmp.eq.s32.totalorder %s14, 0
    %p123 = por %p121, %p122
    %p124 = scmp.ne.s32.totalorder %s116, %s118
    %p125 = scmp.eq.s32.totalorder %s19, 1
    %p126 = por %p124, %p125
    %p127 = scmp.ne.s32.totalorder %s118, %s119
    %p128 = scmp.eq.s32.totalorder %s19, 0
    %p129 = por %p127, %p128
    %p130 = scmp.ne.s32.totalorder %s118, %s119
    %p131 = scmp.eq.s32.totalorder %s20, 1
    %p132 = por %p130, %p131
    %p134 = scmp.ne.s32.totalorder %s119, %s133
    %p135 = scmp.eq.s32.totalorder %s20, 0
    %p136 = por %p134, %p135
    %s138 = sadd.s32 %s137, 1
    %p141 = scmp.eq.s32.totalorder %s14, 1
    %p142 = scmp.ne.s32.totalorder %s137, %s139
    %p143 = scmp.eq.s32.totalorder %s14, 0
    %p144 = por %p142, %p143
    %p145 = scmp.ne.s32.totalorder %s137, %s139
    %p146 = scmp.eq.s32.totalorder %s19, 1
    %p147 = por %p145, %p146
    %p148 = scmp.ne.s32.totalorder %s139, %s140
    %p149 = scmp.eq.s32.totalorder %s19, 0
    %p150 = por %p148, %p149
    %p151 = scmp.ne.s32.totalorder %s139, %s140
    %p152 = scmp.eq.s32.totalorder %s20, 1
    %p153 = por %p151, %p152
    %p155 = scmp.ne.s32.totalorder %s140, %s154
    %p156 = scmp.eq.s32.totalorder %s20, 0
    %p157 = por %p155, %p156
    %s159 = sadd.s32 %s158, 1
    %p162 = scmp.eq.s32.totalorder %s14, 1
    %p163 = scmp.ne.s32.totalorder %s158, %s160
    %p164 = scmp.eq.s32.totalorder %s14, 0
    %p165 = por %p163, %p164
    %p166 = scmp.ne.s32.totalorder %s158, %s160
    %p167 = scmp.eq.s32.totalorder %s19, 1
    %p168 = por %p166, %p167
    %p169 = scmp.ne.s32.totalorder %s160, %s161
    %p170 = scmp.eq.s32.totalorder %s19, 0
    %p171 = por %p169, %p170
    %p172 = scmp.ne.s32.totalorder %s160, %s161
    %p173 = scmp.eq.s32.totalorder %s20, 1
    %p174 = por %p172, %p173
    %p176 = scmp.ne.s32.totalorder %s161, %s175
    %p177 = scmp.eq.s32.totalorder %s20, 0
    %p178 = por %p176, %p177
    %s180 = sadd.s32 %s179, 1
    %p183 = scmp.eq.s32.totalorder %s14, 1
    %p184 = scmp.ne.s32.totalorder %s179, %s181
    %p185 = scmp.eq.s32.totalorder %s14, 0
    %p186 = por %p184, %p185
    %p187 = scmp.ne.s32.totalorder %s179, %s181
    %p188 = scmp.eq.s32.totalorder %s19, 1
    %p189 = por %p187, %p188
    %p190 = scmp.ne.s32.totalorder %s181, %s182
    %p191 = scmp.eq.s32.totalorder %s19, 0
    %p192 = por %p190, %p191
    %p193 = scmp.ne.s32.totalorder %s181, %s182
    %p194 = scmp.eq.s32.totalorder %s20, 1
    %p195 = por %p193, %p194
    %p197 = scmp.ne.s32.totalorder %s182, %s196
    %p198 = scmp.eq.s32.totalorder %s20, 0
    %p199 = por %p197, %p198
    %s200 = ssub.s32 %s14, %s21
    %p201 = scmp.eq.s32.totalorder %s200, 0
    %s203 = sadd.s32 %s202, 1
    %s204 = scalar_select %p201, %s202, %s203
    %p207 = pneg %p201
    %p208 = scmp.eq.s32.totalorder %s14, 1
    %p209 = por %p207, %p208
    %p210 = scmp.ne.s32.totalorder %s202, %s205
    %p211 = scmp.eq.s32.totalorder %s14, 0
    %p212 = por %p210, %p211
    %p213 = scmp.ne.s32.totalorder %s202, %s205
    %p214 = scmp.eq.s32.totalorder %s19, 1
    %p215 = por %p213, %p214
    %p216 = scmp.ne.s32.totalorder %s205, %s206
    %p217 = scmp.eq.s32.totalorder %s19, 0
    %p218 = por %p216, %p217
    %p219 = scmp.ne.s32.totalorder %s205, %s206
    %p220 = scmp.eq.s32.totalorder %s20, 1
    %p221 = por %p219, %p220
    %p223 = scmp.ne.s32.totalorder %s206, %s222
    %p224 = scmp.eq.s32.totalorder %s20, 0
    %p225 = por %p223, %p224
    %p226 = scmp.le.s32.totalorder 1, %s14
    %p227 = scmp.lt.s32.totalorder %s14, 3
    %p228 = pnand %p226, %p227
    %p229 = pneg %p228
    // Predicated region
    $region9: #{nested_block_forward.1} parent=5 // pred_check
      _
    $region10: #{nested_block_forward.1} parent=5 // pred_check_branch
      %231 = sbr.rel (%p228) target = $region12
    $region11: #{nested_block_forward.1} parent=5 // pred_region
      %s232 = ssub.s32 %s14, 1
      // Predicated region
      $region13: #{nested_block_forward.1} parent=11 // pred_check
        %p233 = pneg %p87
      $region14: #{nested_block_forward.1} parent=11 // pred_check_branch
        %235 = sbr.rel (%p233) target = $region16
      $region15: #{nested_block_forward.1} parent=11 // pred_region
        _
      $region16: #{nested_block_forward.1} parent=11 // pred_fallthru
        _
      // Predicated region
      $region17: #{nested_block_forward.1} parent=11 // pred_check
        %p236 = pneg %p108
      $region18: #{nested_block_forward.1} parent=11 // pred_check_branch
        %238 = sbr.rel (%p236) target = $region20
      $region19: #{nested_block_forward.1} parent=11 // pred_region
        _
      $region20: #{nested_block_forward.1} parent=11 // pred_fallthru
        _
      // Predicated region
      $region21: #{nested_block_forward.1} parent=11 // pred_check
        %p239 = pneg %p129
      $region22: #{nested_block_forward.1} parent=11 // pred_check_branch
        %241 = sbr.rel (%p239) target = $region24
      $region23: #{nested_block_forward.1} parent=11 // pred_region
        _
      $region24: #{nested_block_forward.1} parent=11 // pred_fallthru
        _
      // Predicated region
      $region25: #{nested_block_forward.1} parent=11 // pred_check
        %p242 = pneg %p150
      $region26: #{nested_block_forward.1} parent=11 // pred_check_branch
        %244 = sbr.rel (%p242) target = $region28
      $region27: #{nested_block_forward.1} parent=11 // pred_region
        _
      $region28: #{nested_block_forward.1} parent=11 // pred_fallthru
        _
      // Predicated region
      $region29: #{nested_block_forward.1} parent=11 // pred_check
        %p245 = pneg %p171
      $region30: #{nested_block_forward.1} parent=11 // pred_check_branch
        %247 = sbr.rel (%p245) target = $region32
      $region31: #{nested_block_forward.1} parent=11 // pred_region
        _
      $region32: #{nested_block_forward.1} parent=11 // pred_fallthru
        _
      // Predicated region
      $region33: #{nested_block_forward.1} parent=11 // pred_check
        %p248 = pneg %p192
      $region34: #{nested_block_forward.1} parent=11 // pred_check_branch
        %250 = sbr.rel (%p248) target = $region36
      $region35: #{nested_block_forward.1} parent=11 // pred_region
        _
      $region36: #{nested_block_forward.1} parent=11 // pred_fallthru
        _
    $region12: #{nested_block_forward.1} parent=5 // pred_fallthru
      _
    %p251 = scmp.lt.s32.totalorder %s14, 2
    // Predicated region
    $region37: #{nested_block_forward.1} parent=5 // pred_check
      %p252 = pneg %p251
    $region38: #{nested_block_forward.1} parent=5 // pred_check_branch
      %254 = sbr.rel (%p252) target = $region40
    $region39: #{nested_block_forward.1} parent=5 // pred_region
      // Predicated region
      $region41: #{nested_block_forward.1} parent=39 // pred_check
        %p255 = pneg %p34
      $region42: #{nested_block_forward.1} parent=39 // pred_check_branch
        %257 = sbr.rel (%p255) target = $region44
      $region43: #{nested_block_forward.1} parent=39 // pred_region
        %p258 = scmp.lt.s32.totalorder %s14, 1
        %s259 = scalar_select %p258, %s14, 1
        %s260 = smul.addr %s259, 2
        %s261 = smul.addr %s260, 8
        %s262 = scalar_lea.vmem %s0, %s261
      $region44: #{nested_block_forward.1} parent=39 // pred_fallthru
        _
      // Predicated region
      $region45: #{nested_block_forward.1} parent=39 // pred_check
        %p263 = pneg %p60
      $region46: #{nested_block_forward.1} parent=39 // pred_check_branch
        %265 = sbr.rel (%p263) target = $region48
      $region47: #{nested_block_forward.1} parent=39 // pred_region
        %p266 = scmp.lt.s32.totalorder %s14, 1
        %s267 = scalar_select %p266, %s14, 1
        %s268 = smul.addr %s267, 2
        %s269 = smul.addr %s268, 8
        %s270 = scalar_lea.vmem %s1, %s269
      $region48: #{nested_block_forward.1} parent=39 // pred_fallthru
        _
    $region40: #{nested_block_forward.1} parent=5 // pred_fallthru
      _
    %p271 = scmp.le.s32.totalorder 1, %s14
    %p272 = scmp.lt.s32.totalorder %s14, 3
    %p273 = pnand %p271, %p272
    %p274 = pneg %p273
    // Predicated region
    $region49: #{nested_block_forward.1} parent=5 // pred_check
      _
    $region50: #{nested_block_forward.1} parent=5 // pred_check_branch
      %276 = sbr.rel (%p273) target = $region52
    $region51: #{nested_block_forward.1} parent=5 // pred_region
      %s277 = ssub.s32 %s14, 1
      %p278 = scmp.lt.s32.totalorder %s19, 1
      %s279 = scalar_select %p278, %s19, 1
      %s280 = smul.addr %s279, 2
      %s281 = smul.addr %s280, 8
      %s282 = scalar_lea.vmem %s0, %s281
      %p283 = pneg %p40
      %p284 = pneg %p37
      %p285 = scmp.lt.s32.totalorder %s19, 1
      %s286 = scalar_select %p285, %s19, 1
      %s287 = smul.addr %s286, 2
      %s288 = smul.addr %s287, 8
      %s289 = scalar_lea.vmem %s1, %s288
      %p290 = pneg %p66
      %p291 = pneg %p63
      %p292 = pneg %p87
      %p293 = pneg %p84
      %p294 = pneg %p108
      %p295 = pneg %p105
      %p296 = pneg %p129
      %p297 = pneg %p126
      %p298 = pneg %p150
      %p299 = pneg %p147
      %p300 = pneg %p171
      %p301 = pneg %p168
      %p302 = pneg %p192
      %p303 = pneg %p189
      %p304 = pneg %p218
      %p305 = pneg %p215
      %p306 = scmp.lt.s32.totalorder %s19, 1
      %s307 = scalar_select %p306, %s19, 1
      %s308 = smul.addr %s307, 2
      %s309 = smul.addr %s308, 8
      %s310 = scalar_lea.vmem %s8, %s309
      %p311 = scmp.lt.s32.totalorder %s19, 1
      %s312 = scalar_select %p311, %s19, 1
      %s313 = smul.addr %s312, 2
      %s314 = smul.addr %s313, 8
      %s315 = scalar_lea.vmem %s0, %s314
      %p316 = scmp.lt.s32.totalorder %s19, 1
      %s317 = scalar_select %p316, %s19, 1
      %s318 = smul.addr %s317, 2
      %s319 = smul.addr %s318, 8
      %s320 = scalar_lea.vmem %s1, %s319
      %p321 = scmp.lt.s32.totalorder %s19, 1
      %s322 = scalar_select %p321, %s19, 1
      %s323 = smul.addr %s322, 2
      %s324 = smul.addr %s323, 8
      %s325 = scalar_lea.vmem %s8, %s324
      %326 = vst [vmem:[#allocation2] sm:$0x1] 0.0
      %327 = vst [vmem:[#allocation2 + $0x11] sm:$0x1] 0.0
      %v328 = vld [vmem:[%s315] sm:$0xff]
      %v329 = vld [vmem:[%s315 + $0x8] sm:$0xff]
      %vm330 = vcmask 523264
      %331 = vst.msk [vmem:[#allocation2 + $0x1] sm:$0xff] %vm330, %v328
      %332 = vst.msk [vmem:[#allocation2 + $0x9] sm:$0xff] %vm330, %v329
      %v333 = vld [vmem:[%s320] sm:$0xff]
      %v334 = vld [vmem:[%s320 + $0x8] sm:$0xff]
      %337 = vrot.lane.b32.xlu0 %v333, 64
      %v338 = vpop.permute.xlu0 %337
      %339 = vrot.lane.b32.xlu0 %v334, 64
      %v340 = vpop.permute.xlu0 %339
      %vm343 = vcmask 1048064
      %344 = vst.msk [vmem:[#allocation2 + $0x1] sm:$0xff] %vm343, %v338
      %345 = vst.msk [vmem:[#allocation2 + $0x9] sm:$0xff] %vm343, %v340
      %346 = vst [vmem:[#allocation3] sm:$0x1] 0.0
      %347 = vst [vmem:[#allocation3 + $0x11] sm:$0x1] 0.0
      %v348 = vld [vmem:[#allocation2] sm:$0xff]
      %v349 = vld [vmem:[#allocation2 + $0x8] sm:$0xff]
      %v350 = vld [vmem:[%s2] sm:$0xff]
      %v351 = vld [vmem:[%s2 + $0x8] sm:$0xff]
      %v352 = vld [vmem:[%s2 + $0x10] sm:$0xff]
      %v353 = vld [vmem:[%s2 + $0x18] sm:$0xff]
      %v354 = vld [vmem:[%s2 + $0x20] sm:$0xff]
      %v355 = vld [vmem:[%s2 + $0x28] sm:$0xff]
      %v356 = vld [vmem:[%s2 + $0x30] sm:$0xff]
      %v357 = vld [vmem:[%s2 + $0x38] sm:$0xff]
      %v358 = vld [vmem:[%s2 + $0x40] sm:$0xff]
      %v359 = vld [vmem:[%s2 + $0x48] sm:$0xff]
      %v360 = vld [vmem:[%s2 + $0x50] sm:$0xff]
      %v361 = vld [vmem:[%s2 + $0x58] sm:$0xff]
      %v362 = vld [vmem:[%s2 + $0x60] sm:$0xff]
      %v363 = vld [vmem:[%s2 + $0x68] sm:$0xff]
      %v364 = vld [vmem:[%s2 + $0x70] sm:$0xff]
      %v365 = vld [vmem:[%s2 + $0x78] sm:$0xff]
      %v366 = vld [vmem:[#allocation2 + $0x1] sm:$0xff]
      %v367 = vld [vmem:[#allocation2 + $0x9] sm:$0xff]
      %s368 = scalar_lea.vmem %s2, 128
      %v369 = vld [vmem:[%s368] sm:$0xff]
      %v370 = vld [vmem:[%s368 + $0x8] sm:$0xff]
      %v371 = vld [vmem:[%s368 + $0x10] sm:$0xff]
      %v372 = vld [vmem:[%s368 + $0x18] sm:$0xff]
      %v373 = vld [vmem:[%s368 + $0x20] sm:$0xff]
      %v374 = vld [vmem:[%s368 + $0x28] sm:$0xff]
      %v375 = vld [vmem:[%s368 + $0x30] sm:$0xff]
      %v376 = vld [vmem:[%s368 + $0x38] sm:$0xff]
      %v377 = vld [vmem:[%s368 + $0x40] sm:$0xff]
      %v378 = vld [vmem:[%s368 + $0x48] sm:$0xff]
      %v379 = vld [vmem:[%s368 + $0x50] sm:$0xff]
      %v380 = vld [vmem:[%s368 + $0x58] sm:$0xff]
      %v381 = vld [vmem:[%s368 + $0x60] sm:$0xff]
      %v382 = vld [vmem:[%s368 + $0x68] sm:$0xff]
      %v383 = vld [vmem:[%s368 + $0x70] sm:$0xff]
      %v384 = vld [vmem:[%s368 + $0x78] sm:$0xff]
      %385 = vmatpush.msra.mxu0 %v384
      %386 = vmatpush.msra.mxu0 %v383
      %387 = vmatpush.msra.mxu0 %v382
      %388 = vmatpush.msra.mxu0 %v381
      %389 = vmatpush.msra.mxu0 %v380
      %390 = vmatpush.msra.mxu0 %v379
      %391 = vmatpush.msra.mxu0 %v378
      %392 = vmatpush.msra.mxu0 %v377
      %393 = vmatpush.msra.mxu0 %v376
      %394 = vmatpush.msra.mxu0 %v375
      %395 = vmatpush.msra.mxu0 %v374
      %396 = vmatpush.msra.mxu0 %v373
      %397 = vmatpush.msra.mxu0 %v372
      %398 = vmatpush.msra.mxu0 %v371
      %399 = vmatpush.msra.mxu0 %v370
      %400 = vmatpush.msra.mxu0 %v369
      %401 = vmatmul.f32.gmra.mxu0 %v366
      %v402 = vpop.f32.mrf.mxu0
      %v403 = vadd.f32 0.0, %v402
      %404 = vmatmul.f32.gmra.mxu0 %v367
      %v405 = vpop.f32.mrf.mxu0
      %v406 = vadd.f32 0.0, %v405
      %407 = vdwg.mxu0
      %408 = vmatpush.msra.mxu0 %v365
      %409 = vmatpush.msra.mxu0 %v364
      %410 = vmatpush.msra.mxu0 %v363
      %411 = vmatpush.msra.mxu0 %v362
      %412 = vmatpush.msra.mxu0 %v361
      %413 = vmatpush.msra.mxu0 %v360
      %414 = vmatpush.msra.mxu0 %v359
      %415 = vmatpush.msra.mxu0 %v358
      %416 = vmatpush.msra.mxu0 %v357
      %417 = vmatpush.msra.mxu0 %v356
      %418 = vmatpush.msra.mxu0 %v355
      %419 = vmatpush.msra.mxu0 %v354
      %420 = vmatpush.msra.mxu0 %v353
      %421 = vmatpush.msra.mxu0 %v352
      %422 = vmatpush.msra.mxu0 %v351
      %423 = vmatpush.msra.mxu0 %v350
      %424 = vmatmul.f32.gmra.mxu0 %v348
      %v425 = vpop.f32.mrf.mxu0
      %v426 = vadd.f32 %v403, %v425
      %427 = vmatmul.f32.gmra.mxu0 %v349
      %v428 = vpop.f32.mrf.mxu0
      %v429 = vadd.f32 %v406, %v428
      %430 = vdwg.mxu0
      %v431 = vld [vmem:[#allocation2 + $0x2] sm:$0xff]
      %v432 = vld [vmem:[#allocation2 + $0xa] sm:$0xff]
      %s433 = scalar_lea.vmem %s2, 256
      %v434 = vld [vmem:[%s433] sm:$0xff]
      %v435 = vld [vmem:[%s433 + $0x8] sm:$0xff]
      %v436 = vld [vmem:[%s433 + $0x10] sm:$0xff]
      %v437 = vld [vmem:[%s433 + $0x18] sm:$0xff]
      %v438 = vld [vmem:[%s433 + $0x20] sm:$0xff]
      %v439 = vld [vmem:[%s433 + $0x28] sm:$0xff]
      %v440 = vld [vmem:[%s433 + $0x30] sm:$0xff]
      %v441 = vld [vmem:[%s433 + $0x38] sm:$0xff]
      %v442 = vld [vmem:[%s433 + $0x40] sm:$0xff]
      %v443 = vld [vmem:[%s433 + $0x48] sm:$0xff]
      %v444 = vld [vmem:[%s433 + $0x50] sm:$0xff]
      %v445 = vld [vmem:[%s433 + $0x58] sm:$0xff]
      %v446 = vld [vmem:[%s433 + $0x60] sm:$0xff]
      %v447 = vld [vmem:[%s433 + $0x68] sm:$0xff]
      %v448 = vld [vmem:[%s433 + $0x70] sm:$0xff]
      %v449 = vld [vmem:[%s433 + $0x78] sm:$0xff]
      %450 = vmatpush.msra.mxu0 %v449
      %451 = vmatpush.msra.mxu0 %v448
      %452 = vmatpush.msra.mxu0 %v447
      %453 = vmatpush.msra.mxu0 %v446
      %454 = vmatpush.msra.mxu0 %v445
      %455 = vmatpush.msra.mxu0 %v444
      %456 = vmatpush.msra.mxu0 %v443
      %457 = vmatpush.msra.mxu0 %v442
      %458 = vmatpush.msra.mxu0 %v441
      %459 = vmatpush.msra.mxu0 %v440
      %460 = vmatpush.msra.mxu0 %v439
      %461 = vmatpush.msra.mxu0 %v438
      %462 = vmatpush.msra.mxu0 %v437
      %463 = vmatpush.msra.mxu0 %v436
      %464 = vmatpush.msra.mxu0 %v435
      %465 = vmatpush.msra.mxu0 %v434
      %466 = vmatmul.f32.gmra.mxu0 %v431
      %v467 = vpop.f32.mrf.mxu0
      %v468 = vadd.f32 0.0, %v467
      %469 = vmatmul.f32.gmra.mxu0 %v432
      %v470 = vpop.f32.mrf.mxu0
      %v471 = vadd.f32 0.0, %v470
      %472 = vdwg.mxu0
      %v473 = vadd.f32 %v426, %v468
      %v474 = vadd.f32 %v429, %v471
      %v475 = vld [vmem:[%s3] sm:$0x1]
      %v477 = vperm.slane %v475, 0
      %v479 = vmul.f32 %v473, %v477
      %v480 = vmul.f32 %v474, %v477
      %v481 = vld [vmem:[%s4] sm:$0x1]
      %v483 = vperm.slane %v481, 0
      %v485 = vadd.f32 %v479, %v483
      %v486 = vadd.f32 %v480, %v483
      %v487 = vmax.f32 %v485, 0.0
      %v488 = vmax.f32 %v486, 0.0
      %489 = vst [vmem:[#allocation3 + $0x1] sm:$0xff] %v487
      %490 = vst [vmem:[#allocation3 + $0x9] sm:$0xff] %v488
      %v491 = vld [vmem:[#allocation3] sm:$0xff]
      %v492 = vld [vmem:[#allocation3 + $0x8] sm:$0xff]
      %v493 = vld [vmem:[%s5] sm:$0xff]
      %v494 = vld [vmem:[%s5 + $0x8] sm:$0xff]
      %v495 = vld [vmem:[%s5 + $0x10] sm:$0xff]
      %v496 = vld [vmem:[%s5 + $0x18] sm:$0xff]
      %v497 = vld [vmem:[%s5 + $0x20] sm:$0xff]
      %v498 = vld [vmem:[%s5 + $0x28] sm:$0xff]
      %v499 = vld [vmem:[%s5 + $0x30] sm:$0xff]
      %v500 = vld [vmem:[%s5 + $0x38] sm:$0xff]
      %v501 = vld [vmem:[%s5 + $0x40] sm:$0xff]
      %v502 = vld [vmem:[%s5 + $0x48] sm:$0xff]
      %v503 = vld [vmem:[%s5 + $0x50] sm:$0xff]
      %v504 = vld [vmem:[%s5 + $0x58] sm:$0xff]
      %v505 = vld [vmem:[%s5 + $0x60] sm:$0xff]
      %v506 = vld [vmem:[%s5 + $0x68] sm:$0xff]
      %v507 = vld [vmem:[%s5 + $0x70] sm:$0xff]
      %v508 = vld [vmem:[%s5 + $0x78] sm:$0xff]
      %v509 = vld [vmem:[#allocation3 + $0x1] sm:$0xff]
      %v510 = vld [vmem:[#allocation3 + $0x9] sm:$0xff]
      %s511 = scalar_lea.vmem %s5, 128
      %v512 = vld [vmem:[%s511] sm:$0xff]
      %v513 = vld [vmem:[%s511 + $0x8] sm:$0xff]
      %v514 = vld [vmem:[%s511 + $0x10] sm:$0xff]
      %v515 = vld [vmem:[%s511 + $0x18] sm:$0xff]
      %v516 = vld [vmem:[%s511 + $0x20] sm:$0xff]
      %v517 = vld [vmem:[%s511 + $0x28] sm:$0xff]
      %v518 = vld [vmem:[%s511 + $0x30] sm:$0xff]
      %v519 = vld [vmem:[%s511 + $0x38] sm:$0xff]
      %v520 = vld [vmem:[%s511 + $0x40] sm:$0xff]
      %v521 = vld [vmem:[%s511 + $0x48] sm:$0xff]
      %v522 = vld [vmem:[%s511 + $0x50] sm:$0xff]
      %v523 = vld [vmem:[%s511 + $0x58] sm:$0xff]
      %v524 = vld [vmem:[%s511 + $0x60] sm:$0xff]
      %v525 = vld [vmem:[%s511 + $0x68] sm:$0xff]
      %v526 = vld [vmem:[%s511 + $0x70] sm:$0xff]
      %v527 = vld [vmem:[%s511 + $0x78] sm:$0xff]
      %528 = vmatpush.msra.mxu0 %v527
      %529 = vmatpush.msra.mxu0 %v526
      %530 = vmatpush.msra.mxu0 %v525
      %531 = vmatpush.msra.mxu0 %v524
      %532 = vmatpush.msra.mxu0 %v523
      %533 = vmatpush.msra.mxu0 %v522
      %534 = vmatpush.msra.mxu0 %v521
      %535 = vmatpush.msra.mxu0 %v520
      %536 = vmatpush.msra.mxu0 %v519
      %537 = vmatpush.msra.mxu0 %v518
      %538 = vmatpush.msra.mxu0 %v517
      %539 = vmatpush.msra.mxu0 %v516
      %540 = vmatpush.msra.mxu0 %v515
      %541 = vmatpush.msra.mxu0 %v514
      %542 = vmatpush.msra.mxu0 %v513
      %543 = vmatpush.msra.mxu0 %v512
      %544 = vmatmul.f32.gmra.mxu0 %v509
      %v545 = vpop.f32.mrf.mxu0
      %v546 = vadd.f32 0.0, %v545
      %547 = vmatmul.f32.gmra.mxu0 %v510
      %v548 = vpop.f32.mrf.mxu0
      %v549 = vadd.f32 0.0, %v548
      %550 = vdwg.mxu0
      %551 = vmatpush.msra.mxu0 %v508
      %552 = vmatpush.msra.mxu0 %v507
      %553 = vmatpush.msra.mxu0 %v506
      %554 = vmatpush.msra.mxu0 %v505
      %555 = vmatpush.msra.mxu0 %v504
      %556 = vmatpush.msra.mxu0 %v503
      %557 = vmatpush.msra.mxu0 %v502
      %558 = vmatpush.msra.mxu0 %v501
      %559 = vmatpush.msra.mxu0 %v500
      %560 = vmatpush.msra.mxu0 %v499
      %561 = vmatpush.msra.mxu0 %v498
      %562 = vmatpush.msra.mxu0 %v497
      %563 = vmatpush.msra.mxu0 %v496
      %564 = vmatpush.msra.mxu0 %v495
      %565 = vmatpush.msra.mxu0 %v494
      %566 = vmatpush.msra.mxu0 %v493
      %567 = vmatmul.f32.gmra.mxu0 %v491
      %v568 = vpop.f32.mrf.mxu0
      %v569 = vadd.f32 %v546, %v568
      %570 = vmatmul.f32.gmra.mxu0 %v492
      %v571 = vpop.f32.mrf.mxu0
      %v572 = vadd.f32 %v549, %v571
      %573 = vdwg.mxu0
      %v574 = vld [vmem:[#allocation3 + $0x2] sm:$0xff]
      %v575 = vld [vmem:[#allocation3 + $0xa] sm:$0xff]
      %s576 = scalar_lea.vmem %s5, 256
      %v577 = vld [vmem:[%s576] sm:$0xff]
      %v578 = vld [vmem:[%s576 + $0x8] sm:$0xff]
      %v579 = vld [vmem:[%s576 + $0x10] sm:$0xff]
      %v580 = vld [vmem:[%s576 + $0x18] sm:$0xff]
      %v581 = vld [vmem:[%s576 + $0x20] sm:$0xff]
      %v582 = vld [vmem:[%s576 + $0x28] sm:$0xff]
      %v583 = vld [vmem:[%s576 + $0x30] sm:$0xff]
      %v584 = vld [vmem:[%s576 + $0x38] sm:$0xff]
      %v585 = vld [vmem:[%s576 + $0x40] sm:$0xff]
      %v586 = vld [vmem:[%s576 + $0x48] sm:$0xff]
      %v587 = vld [vmem:[%s576 + $0x50] sm:$0xff]
      %v588 = vld [vmem:[%s576 + $0x58] sm:$0xff]
      %v589 = vld [vmem:[%s576 + $0x60] sm:$0xff]
      %v590 = vld [vmem:[%s576 + $0x68] sm:$0xff]
      %v591 = vld [vmem:[%s576 + $0x70] sm:$0xff]
      %v592 = vld [vmem:[%s576 + $0x78] sm:$0xff]
      %593 = vmatpush.msra.mxu0 %v592
      %594 = vmatpush.msra.mxu0 %v591
      %595 = vmatpush.msra.mxu0 %v590
      %596 = vmatpush.msra.mxu0 %v589
      %597 = vmatpush.msra.mxu0 %v588
      %598 = vmatpush.msra.mxu0 %v587
      %599 = vmatpush.msra.mxu0 %v586
      %600 = vmatpush.msra.mxu0 %v585
      %601 = vmatpush.msra.mxu0 %v584
      %602 = vmatpush.msra.mxu0 %v583
      %603 = vmatpush.msra.mxu0 %v582
      %604 = vmatpush.msra.mxu0 %v581
      %605 = vmatpush.msra.mxu0 %v580
      %606 = vmatpush.msra.mxu0 %v579
      %607 = vmatpush.msra.mxu0 %v578
      %608 = vmatpush.msra.mxu0 %v577
      %609 = vmatmul.f32.gmra.mxu0 %v574
      %v610 = vpop.f32.mrf.mxu0
      %v611 = vadd.f32 0.0, %v610
      %612 = vmatmul.f32.gmra.mxu0 %v575
      %v613 = vpop.f32.mrf.mxu0
      %v614 = vadd.f32 0.0, %v613
      %615 = vdwg.mxu0
      %v616 = vadd.f32 %v569, %v611
      %v617 = vadd.f32 %v572, %v614
      %v618 = vld [vmem:[%s6] sm:$0x1]
      %v620 = vperm.slane %v618, 0
      %v622 = vmul.f32 %v616, %v620
      %v623 = vmul.f32 %v617, %v620
      %v624 = vld [vmem:[%s7] sm:$0x1]
      %v626 = vperm.slane %v624, 0
      %v628 = vadd.f32 %v622, %v626
      %v629 = vadd.f32 %v623, %v626
      %v630 = vmax.f32 %v628, 0.0
      %v631 = vmax.f32 %v629, 0.0
      %632 = vst [vmem:[%s325] sm:$0xff] %v630
      %633 = vst [vmem:[%s325 + $0x8] sm:$0xff] %v631
      %p634 = scmp.lt.s32.totalorder %s19, 1
      %s635 = scalar_select %p634, %s19, 1
      %s636 = smul.addr %s635, 2
      %s637 = smul.addr %s636, 8
      %s638 = scalar_lea.vmem %s8, %s637
      // Predicated region
      $region53: #{nested_block_forward.1} parent=51 // pred_check
        %p639 = pneg %p215
      $region54: #{nested_block_forward.1} parent=51 // pred_check_branch
        %641 = sbr.rel (%p639) target = $region56
      $region55: #{nested_block_forward.1} parent=51 // pred_region
        _
      $region56: #{nested_block_forward.1} parent=51 // pred_fallthru
        _
    $region52: #{nested_block_forward.1} parent=5 // pred_fallthru
      _
    %p642 = scmp.le.s32.totalorder 2, %s14
    // Predicated region
    $region57: #{nested_block_forward.1} parent=5 // pred_check
      %p643 = pneg %p642
    $region58: #{nested_block_forward.1} parent=5 // pred_check_branch
      %645 = sbr.rel (%p643) target = $region60
    $region59: #{nested_block_forward.1} parent=5 // pred_region
      %s646 = ssub.s32 %s14, 2
      // Predicated region
      $region61: #{nested_block_forward.1} parent=59 // pred_check
        %p647 = pneg %p221
      $region62: #{nested_block_forward.1} parent=59 // pred_check_branch
        %649 = sbr.rel (%p647) target = $region64
      $region63: #{nested_block_forward.1} parent=59 // pred_region
        %p650 = scmp.lt.s32.totalorder %s20, 1
        %s651 = scalar_select %p650, %s20, 1
        %s652 = smul.addr %s651, 2
        %s653 = smul.addr %s652, 8
        %s654 = scalar_lea.vmem %s8, %s653
      $region64: #{nested_block_forward.1} parent=59 // pred_fallthru
        _
    $region60: #{nested_block_forward.1} parent=5 // pred_fallthru
      _
  $region6: #{nested_block_forward.1} parent=0 // loop_footer
    %s18 = sadd.s32 1, %s14
  $region7: #{nested_block_forward.1} parent=0 // loop_footer_branch
    %13 = sbr.rel target = $region3
  $region8: #{nested_block_forward.1} parent=0 // loop_exit
    _

</llo_original>
